<compile_context>
chip_gen: v7x
topology: tpu7x:2x2x1
jax: 0.10.0
libtpu: 0.0.40
codegen_flags: <defaults>
</compile_context>

<pallas_src>
import functools

import jax
import jax.numpy as jnp
from jax import lax
from jax.experimental import pallas as pl
from jax.experimental.pallas import tpu as pltpu


def _attention_kernel(x_ref, wqkv_ref, wo_ref, bo_ref, o_ref, *,
                      heads, dim_head, scale, mxu_dtype):
    bb, n, dim = x_ref.shape          # static block shape
    m = bb * n
    inner = heads * dim_head

    # Flatten the batch-block (leading-dim merge only, no relayout): every
    # matmul below sees M = bb*n rows on the MXU.
    x2d = x_ref[...].reshape(m, dim).astype(mxu_dtype)

    # (1) Fused QKV projection: single lane-dense matmul, N = 3*inner lanes.
    qkv = jnp.dot(x2d, wqkv_ref[...], preferred_element_type=jnp.float32)

    # Block-diagonal additive mask so the flattened (m, m) scores only attend
    # within their own example.  Built once per grid step, outside the head
    # loop; not needed at all when the block holds a single batch row.
    if bb > 1:
        row_b = lax.broadcasted_iota(jnp.int32, (m, m), 0) // n
        col_b = lax.broadcasted_iota(jnp.int32, (m, m), 1) // n
        mask = jnp.where(row_b == col_b, jnp.float32(0.0), jnp.float32(-1e30))
    else:
        mask = None

    dn = (((1,), (1,)), ((), ()))     # contract on d of both: q @ k^T, no transpose op

    # (2) Per-head attention; `heads` is a tiny static constant -> unrolled.
    head_outs = []
    for h in range(heads):
        q_h = qkv[:, h * dim_head:(h + 1) * dim_head] * scale           # (m, d)
        k_h = qkv[:, inner + h * dim_head: inner + (h + 1) * dim_head]
        v_h = qkv[:, 2 * inner + h * dim_head: 2 * inner + (h + 1) * dim_head]

        s = lax.dot_general(q_h.astype(mxu_dtype), k_h.astype(mxu_dtype), dn,
                            preferred_element_type=jnp.float32)         # (m, m)
        if mask is not None:
            s = s + mask
        # f32 softmax (max-subtracted); masked entries underflow to exactly 0.
        s = s - jnp.max(s, axis=-1, keepdims=True)
        p = jnp.exp(s)
        l = jnp.sum(p, axis=-1, keepdims=True)
        inv_l = pl.reciprocal(l, approx=True)        # EUP slot
        inv_l = inv_l * (2.0 - l * inv_l)            # one Newton step -> ~exact

        o_h = jnp.dot(p.astype(mxu_dtype), v_h.astype(mxu_dtype),
                      preferred_element_type=jnp.float32) * inv_l       # (m, d)
        head_outs.append(o_h)

    # (3) Single output projection with K = inner (lane-concat the heads).
    o_slab = jnp.concatenate(head_outs, axis=-1).astype(mxu_dtype)      # (m, inner)
    y = jnp.dot(o_slab, wo_ref[...], preferred_element_type=jnp.float32)
    y = y + bo_ref[...]               # bias: one broadcast add per grid step

    # TODO(synk): if profiling at large block_b shows the 32-lane masked vst
    # dominating, present the output as a lane-dense (bb, n*dim) slab instead
    # (costs an in-kernel sublane->lane repack).
    o_ref[...] = y.reshape(bb, n, dim).astype(o_ref.dtype)


def attention_forward(x, w_qkv, w_out, b_out, *, heads, dim_head,
                      mxu_dtype=jnp.bfloat16, block_b=None):
    """x: (b, n, dim); w_qkv: (dim, 3*inner); w_out: (inner, dim); b_out: (1, dim).

    mxu_dtype: operand dtype fed to the MXU (accumulation is always f32).
    bf16 is the recommended default on v5e/v6e/v7x (all MXUs are bf16-native);
    use f32 operands only when exact module math is required.
    """
    b, n, dim = x.shape
    inner = heads * dim_head
    assert w_qkv.shape == (dim, 3 * inner)
    assert w_out.shape == (inner, dim)
    out_dtype = x.dtype
    scale = float(dim_head) ** -0.5

    w_qkv_c = w_qkv.astype(mxu_dtype)         # fused weight: one lane-dense block
    w_out_c = w_out.astype(mxu_dtype)
    b_o = b_out.astype(jnp.float32)

    # ---- block_b: target M = block_b*n ~= 256 rows (MXU depth on v6e/v7x)
    # while keeping the grid >= 2 steps whenever the batch allows so v7x's two
    # TensorCores (and megacore) both get work.
    if block_b is None:
        target_rows = 256
        block_b = 1
        for cand in range(1, b + 1):
            if b % cand == 0 and cand * n <= target_rows:
                block_b = cand
        if b >= 2 and b // block_b < 2:
            cands = [c for c in range(1, b) if b % c == 0 and c * n <= target_rows]
            if cands:
                block_b = max(cands)
    assert b % block_b == 0, "block_b must divide batch"
    m = block_b * n
    # Flattened block-diagonal scores are (m, m) f32 per head; keep them small.
    assert m <= 1024, "block_b * n too large for the flattened score path"
    # TODO(synk): add a per-example batched score fallback for block_b*n > 1024.
    nb = b // block_b

    kernel = functools.partial(_attention_kernel, heads=heads, dim_head=dim_head,
                               scale=scale, mxu_dtype=mxu_dtype)

    it_w = jnp.dtype(mxu_dtype).itemsize
    cost = pl.CostEstimate(
        flops=(2 * b * n * dim * 3 * inner                # fused qkv projection
               + 4 * nb * heads * m * m * dim_head        # scores + attn@v (flattened)
               + 2 * b * n * inner * dim),                # output projection
        transcendentals=nb * heads * m * m,               # exp in softmax
        bytes_accessed=(x.size * x.dtype.itemsize
                        + (w_qkv_c.size + w_out_c.size) * it_w + b_o.size * 4
                        + b * n * dim * jnp.dtype(out_dtype).itemsize))

    # VMEM budget: double-buffered pipelined blocks + in-kernel temporaries.
    block_bytes = (2 * block_b * n * dim
                   * (x.dtype.itemsize + jnp.dtype(out_dtype).itemsize)
                   + 2 * (w_qkv_c.size + w_out_c.size) * it_w + 2 * b_o.size * 4)
    temp_bytes = 4 * (m * 3 * inner + m * m + m * inner + m * dim) * 4
    vmem_limit = int(min(64 * 2**20, max(32 * 2**20, 2 * (block_bytes + temp_bytes))))
    # TODO(synk): at larger dim/inner, single-buffer the grid-invariant weight
    # blocks (pipeline_mode=pl.Buffered(1)) to halve their VMEM footprint.

    return pl.pallas_call(
        kernel,
        out_shape=jax.ShapeDtypeStruct((b, n, dim), out_dtype),
        grid_spec=pltpu.PrefetchScalarGridSpec(
            num_scalar_prefetch=0,
            grid=(nb,),
            in_specs=[
                pl.BlockSpec((block_b, n, dim), lambda i: (i, 0, 0)),   # x
                pl.BlockSpec((dim, 3 * inner), lambda i: (0, 0)),       # W_qkv (fused)
                pl.BlockSpec((inner, dim), lambda i: (0, 0)),           # W_out
                pl.BlockSpec((1, dim), lambda i: (0, 0)),               # b_out
            ],
            out_specs=pl.BlockSpec((block_b, n, dim), lambda i: (i, 0, 0)),
        ),
        compiler_params=pltpu.CompilerParams(
            dimension_semantics=("parallel",),
            vmem_limit_bytes=vmem_limit),
        cost_estimate=cost,
    )(x, w_qkv_c, w_out_c, b_o)


def _reference(x, w_qkv, w_out, b_out, *, heads, dim_head):
    """Pure-JAX reference matching the PyTorch forward (eval mode, dropout=0)."""
    b, n, dim = x.shape
    inner = heads * dim_head
    scale = float(dim_head) ** -0.5
    qkv = jnp.einsum('bnd,de->bne', x, w_qkv)
    q, k, v = jnp.split(qkv, 3, axis=-1)

    def to_heads(t):  # 'b n (h d) -> b h n d'
        return t.reshape(b, n, heads, dim_head).transpose(0, 2, 1, 3)

    q, k, v = map(to_heads, (q, k, v))
    dots = jnp.einsum('bhid,bhjd->bhij', q, k) * scale
    attn = jax.nn.softmax(dots, axis=-1)
    out = jnp.einsum('bhij,bhjd->bhid', attn, v)
    out = out.transpose(0, 2, 1, 3).reshape(b, n, inner)
    return jnp.einsum('bne,ed->bnd', out, w_out) + b_out[0]


if __name__ == "__main__":
    # Small shapes consistent with the module's forward: x is (b, n, dim).
    B, N, DIM = 2, 8, 32
    HEADS, DIM_HEAD = 4, 16
    INNER = HEADS * DIM_HEAD

    key = jax.random.PRNGKey(0)
    kx, kw1, kw2, kb = jax.random.split(key, 4)

    x = jax.random.normal(kx, (B, N, DIM), dtype=jnp.float32)
    w_qkv = jax.random.normal(kw1, (DIM, 3 * INNER), dtype=jnp.float32) * (DIM ** -0.5)
    w_out = jax.random.normal(kw2, (INNER, DIM), dtype=jnp.float32) * (INNER ** -0.5)
    b_out = jax.random.normal(kb, (1, DIM), dtype=jnp.float32) * 0.02
    # Dropout(p=0.0) -> identity (eval semantics); nothing to implement.

    y_ref = _reference(x, w_qkv, w_out, b_out, heads=HEADS, dim_head=DIM_HEAD)

    # Exact-math path: f32 MXU operands (only diff is the Newton-refined
    # reciprocal in the softmax denominator -> ~1e-6 level).
    y32 = attention_forward(x, w_qkv, w_out, b_out, heads=HEADS, dim_head=DIM_HEAD,
                            mxu_dtype=jnp.float32)
    y32 = jax.block_until_ready(y32)
    assert y32.shape == (B, N, DIM)
    assert jnp.allclose(y32, y_ref, atol=2e-3, rtol=2e-3), "f32 mismatch vs reference"

    # Fast path: bf16 MXU operands / f32 accumulation (recommended default on
    # v5e/v6e/v7x; softmax stays f32).  Check max and mean error.
    ybf = attention_forward(x, w_qkv, w_out, b_out, heads=HEADS, dim_head=DIM_HEAD,
                            mxu_dtype=jnp.bfloat16)
    ybf = jax.block_until_ready(ybf)
    err = jnp.abs(ybf.astype(jnp.float32) - y_ref)
    assert float(jnp.max(err)) < 1e-1, "bf16 max-error too large vs reference"
    assert float(jnp.mean(err)) < 2e-2, "bf16 mean-error too large vs reference"

    print("KERNEL_OK")
</pallas_src>

<mosaic_0001>
module attributes {stable_mosaic.version = 11 : i64} {
  func.func @_attention_kernel(%arg0: i32, %arg1: memref<1x8x32xf32, #tpu.memory_space<vmem>>, %arg2: memref<32x192xf32, #tpu.memory_space<vmem>>, %arg3: memref<64x32xf32, #tpu.memory_space<vmem>>, %arg4: memref<1x32xf32, #tpu.memory_space<vmem>>, %arg5: memref<1x8x32xf32, #tpu.memory_space<vmem>>) attributes {dimension_semantics = [#tpu.dimension_semantics<parallel>], iteration_bounds = array<i64: 2>, scalar_prefetch = 0 : i64, scratch_operands = 0 : i64, tpu.core_type = #tpu.core_type<tc>, window_params = [{transform_indices = @transform_0, window_bounds = array<i64: 1, 8, 32>}, {pipeline_mode = #tpu.pipeline_mode<synchronous>, transform_indices = @transform_1, window_bounds = array<i64: 32, 192>}, {pipeline_mode = #tpu.pipeline_mode<synchronous>, transform_indices = @transform_2, window_bounds = array<i64: 64, 32>}, {pipeline_mode = #tpu.pipeline_mode<synchronous>, transform_indices = @transform_3, window_bounds = array<i64: 1, 32>}, {transform_indices = @transform_4, window_bounds = array<i64: 1, 8, 32>}]} {
    %c0 = arith.constant 0 : index
    %c0_0 = arith.constant 0 : index
    %c0_1 = arith.constant 0 : index
    %0 = vector.load %arg1[%c0, %c0_0, %c0_1] : memref<1x8x32xf32, #tpu.memory_space<vmem>>, vector<1x8x32xf32>
    %1 = vector.shape_cast %0 : vector<1x8x32xf32> to vector<8x32xf32>
    %c0_2 = arith.constant 0 : index
    %c0_3 = arith.constant 0 : index
    %2 = vector.load %arg2[%c0_2, %c0_3] : memref<32x192xf32, #tpu.memory_space<vmem>>, vector<32x192xf32>
    %cst = arith.constant dense<0.000000e+00> : vector<8x192xf32>
    %3 = tpu.matmul %1, %2, %cst {dimension_numbers = #tpu.dot_dimension_numbers<[1], [0], [0], [1], [0, 0, 1, 1], [], []>} : vector<8x32xf32>, vector<32x192xf32>, vector<8x192xf32> -> vector<8x192xf32>
    %4 = vector.extract_strided_slice %3 {offsets = [0, 0], sizes = [8, 16], strides = [1, 1]} : vector<8x192xf32> to vector<8x16xf32>
    %cst_4 = arith.constant 2.500000e-01 : f32
    %5 = vector.broadcast %cst_4 : f32 to vector<8x16xf32>
    %6 = arith.mulf %4, %5 : vector<8x16xf32>
    %7 = vector.extract_strided_slice %3 {offsets = [0, 64], sizes = [8, 16], strides = [1, 1]} : vector<8x192xf32> to vector<8x16xf32>
    %8 = vector.extract_strided_slice %3 {offsets = [0, 128], sizes = [8, 16], strides = [1, 1]} : vector<8x192xf32> to vector<8x16xf32>
    %cst_5 = arith.constant dense<0.000000e+00> : vector<8x8xf32>
    %9 = tpu.matmul %6, %7, %cst_5 {dimension_numbers = #tpu.dot_dimension_numbers<[1], [1], [0], [0], [0, 0, 1, 0], [], []>} : vector<8x16xf32>, vector<8x16xf32>, vector<8x8xf32> -> vector<8x8xf32>
    %cst_6 = arith.constant dense<0xFF800000> : vector<8xf32>
    %10 = vector.multi_reduction <maximumf>, %9, %cst_6 [1] : vector<8x8xf32> to vector<8xf32>
    %11 = vector.shape_cast %10 : vector<8xf32> to vector<8x1xf32>
    %12 = vector.broadcast %11 : vector<8x1xf32> to vector<8x8xf32>
    %13 = arith.subf %9, %12 : vector<8x8xf32>
    %14 = math.exp %13 : vector<8x8xf32>
    %cst_7 = arith.constant dense<0.000000e+00> : vector<8xf32>
    %15 = vector.multi_reduction <add>, %14, %cst_7 [1] : vector<8x8xf32> to vector<8xf32>
    %16 = vector.shape_cast %15 : vector<8xf32> to vector<8x1xf32>
    %17 = tpu.reciprocal %16 {approx = true} : vector<8x1xf32> -> vector<8x1xf32>
    %18 = arith.mulf %16, %17 : vector<8x1xf32>
    %cst_8 = arith.constant 2.000000e+00 : f32
    %19 = vector.broadcast %cst_8 : f32 to vector<8x1xf32>
    %20 = arith.subf %19, %18 : vector<8x1xf32>
    %21 = arith.mulf %17, %20 : vector<8x1xf32>
    %cst_9 = arith.constant dense<0.000000e+00> : vector<8x16xf32>
    %22 = tpu.matmul %14, %8, %cst_9 {dimension_numbers = #tpu.dot_dimension_numbers<[1], [0], [0], [1], [0, 0, 1, 1], [], []>} : vector<8x8xf32>, vector<8x16xf32>, vector<8x16xf32> -> vector<8x16xf32>
    %23 = vector.broadcast %21 : vector<8x1xf32> to vector<8x16xf32>
    %24 = arith.mulf %22, %23 : vector<8x16xf32>
    %25 = vector.extract_strided_slice %3 {offsets = [0, 16], sizes = [8, 16], strides = [1, 1]} : vector<8x192xf32> to vector<8x16xf32>
    %cst_10 = arith.constant 2.500000e-01 : f32
    %26 = vector.broadcast %cst_10 : f32 to vector<8x16xf32>
    %27 = arith.mulf %25, %26 : vector<8x16xf32>
    %28 = vector.extract_strided_slice %3 {offsets = [0, 80], sizes = [8, 16], strides = [1, 1]} : vector<8x192xf32> to vector<8x16xf32>
    %29 = vector.extract_strided_slice %3 {offsets = [0, 144], sizes = [8, 16], strides = [1, 1]} : vector<8x192xf32> to vector<8x16xf32>
    %cst_11 = arith.constant dense<0.000000e+00> : vector<8x8xf32>
    %30 = tpu.matmul %27, %28, %cst_11 {dimension_numbers = #tpu.dot_dimension_numbers<[1], [1], [0], [0], [0, 0, 1, 0], [], []>} : vector<8x16xf32>, vector<8x16xf32>, vector<8x8xf32> -> vector<8x8xf32>
    %cst_12 = arith.constant dense<0xFF800000> : vector<8xf32>
    %31 = vector.multi_reduction <maximumf>, %30, %cst_12 [1] : vector<8x8xf32> to vector<8xf32>
    %32 = vector.shape_cast %31 : vector<8xf32> to vector<8x1xf32>
    %33 = vector.broadcast %32 : vector<8x1xf32> to vector<8x8xf32>
    %34 = arith.subf %30, %33 : vector<8x8xf32>
    %35 = math.exp %34 : vector<8x8xf32>
    %cst_13 = arith.constant dense<0.000000e+00> : vector<8xf32>
    %36 = vector.multi_reduction <add>, %35, %cst_13 [1] : vector<8x8xf32> to vector<8xf32>
    %37 = vector.shape_cast %36 : vector<8xf32> to vector<8x1xf32>
    %38 = tpu.reciprocal %37 {approx = true} : vector<8x1xf32> -> vector<8x1xf32>
    %39 = arith.mulf %37, %38 : vector<8x1xf32>
    %cst_14 = arith.constant 2.000000e+00 : f32
    %40 = vector.broadcast %cst_14 : f32 to vector<8x1xf32>
    %41 = arith.subf %40, %39 : vector<8x1xf32>
    %42 = arith.mulf %38, %41 : vector<8x1xf32>
    %cst_15 = arith.constant dense<0.000000e+00> : vector<8x16xf32>
    %43 = tpu.matmul %35, %29, %cst_15 {dimension_numbers = #tpu.dot_dimension_numbers<[1], [0], [0], [1], [0, 0, 1, 1], [], []>} : vector<8x8xf32>, vector<8x16xf32>, vector<8x16xf32> -> vector<8x16xf32>
    %44 = vector.broadcast %42 : vector<8x1xf32> to vector<8x16xf32>
    %45 = arith.mulf %43, %44 : vector<8x16xf32>
    %46 = vector.extract_strided_slice %3 {offsets = [0, 32], sizes = [8, 16], strides = [1, 1]} : vector<8x192xf32> to vector<8x16xf32>
    %cst_16 = arith.constant 2.500000e-01 : f32
    %47 = vector.broadcast %cst_16 : f32 to vector<8x16xf32>
    %48 = arith.mulf %46, %47 : vector<8x16xf32>
    %49 = vector.extract_strided_slice %3 {offsets = [0, 96], sizes = [8, 16], strides = [1, 1]} : vector<8x192xf32> to vector<8x16xf32>
    %50 = vector.extract_strided_slice %3 {offsets = [0, 160], sizes = [8, 16], strides = [1, 1]} : vector<8x192xf32> to vector<8x16xf32>
    %cst_17 = arith.constant dense<0.000000e+00> : vector<8x8xf32>
    %51 = tpu.matmul %48, %49, %cst_17 {dimension_numbers = #tpu.dot_dimension_numbers<[1], [1], [0], [0], [0, 0, 1, 0], [], []>} : vector<8x16xf32>, vector<8x16xf32>, vector<8x8xf32> -> vector<8x8xf32>
    %cst_18 = arith.constant dense<0xFF800000> : vector<8xf32>
    %52 = vector.multi_reduction <maximumf>, %51, %cst_18 [1] : vector<8x8xf32> to vector<8xf32>
    %53 = vector.shape_cast %52 : vector<8xf32> to vector<8x1xf32>
    %54 = vector.broadcast %53 : vector<8x1xf32> to vector<8x8xf32>
    %55 = arith.subf %51, %54 : vector<8x8xf32>
    %56 = math.exp %55 : vector<8x8xf32>
    %cst_19 = arith.constant dense<0.000000e+00> : vector<8xf32>
    %57 = vector.multi_reduction <add>, %56, %cst_19 [1] : vector<8x8xf32> to vector<8xf32>
    %58 = vector.shape_cast %57 : vector<8xf32> to vector<8x1xf32>
    %59 = tpu.reciprocal %58 {approx = true} : vector<8x1xf32> -> vector<8x1xf32>
    %60 = arith.mulf %58, %59 : vector<8x1xf32>
    %cst_20 = arith.constant 2.000000e+00 : f32
    %61 = vector.broadcast %cst_20 : f32 to vector<8x1xf32>
    %62 = arith.subf %61, %60 : vector<8x1xf32>
    %63 = arith.mulf %59, %62 : vector<8x1xf32>
    %cst_21 = arith.constant dense<0.000000e+00> : vector<8x16xf32>
    %64 = tpu.matmul %56, %50, %cst_21 {dimension_numbers = #tpu.dot_dimension_numbers<[1], [0], [0], [1], [0, 0, 1, 1], [], []>} : vector<8x8xf32>, vector<8x16xf32>, vector<8x16xf32> -> vector<8x16xf32>
    %65 = vector.broadcast %63 : vector<8x1xf32> to vector<8x16xf32>
    %66 = arith.mulf %64, %65 : vector<8x16xf32>
    %67 = vector.extract_strided_slice %3 {offsets = [0, 48], sizes = [8, 16], strides = [1, 1]} : vector<8x192xf32> to vector<8x16xf32>
    %cst_22 = arith.constant 2.500000e-01 : f32
    %68 = vector.broadcast %cst_22 : f32 to vector<8x16xf32>
    %69 = arith.mulf %67, %68 : vector<8x16xf32>
    %70 = vector.extract_strided_slice %3 {offsets = [0, 112], sizes = [8, 16], strides = [1, 1]} : vector<8x192xf32> to vector<8x16xf32>
    %71 = vector.extract_strided_slice %3 {offsets = [0, 176], sizes = [8, 16], strides = [1, 1]} : vector<8x192xf32> to vector<8x16xf32>
    %cst_23 = arith.constant dense<0.000000e+00> : vector<8x8xf32>
    %72 = tpu.matmul %69, %70, %cst_23 {dimension_numbers = #tpu.dot_dimension_numbers<[1], [1], [0], [0], [0, 0, 1, 0], [], []>} : vector<8x16xf32>, vector<8x16xf32>, vector<8x8xf32> -> vector<8x8xf32>
    %cst_24 = arith.constant dense<0xFF800000> : vector<8xf32>
    %73 = vector.multi_reduction <maximumf>, %72, %cst_24 [1] : vector<8x8xf32> to vector<8xf32>
    %74 = vector.shape_cast %73 : vector<8xf32> to vector<8x1xf32>
    %75 = vector.broadcast %74 : vector<8x1xf32> to vector<8x8xf32>
    %76 = arith.subf %72, %75 : vector<8x8xf32>
    %77 = math.exp %76 : vector<8x8xf32>
    %cst_25 = arith.constant dense<0.000000e+00> : vector<8xf32>
    %78 = vector.multi_reduction <add>, %77, %cst_25 [1] : vector<8x8xf32> to vector<8xf32>
    %79 = vector.shape_cast %78 : vector<8xf32> to vector<8x1xf32>
    %80 = tpu.reciprocal %79 {approx = true} : vector<8x1xf32> -> vector<8x1xf32>
    %81 = arith.mulf %79, %80 : vector<8x1xf32>
    %cst_26 = arith.constant 2.000000e+00 : f32
    %82 = vector.broadcast %cst_26 : f32 to vector<8x1xf32>
    %83 = arith.subf %82, %81 : vector<8x1xf32>
    %84 = arith.mulf %80, %83 : vector<8x1xf32>
    %cst_27 = arith.constant dense<0.000000e+00> : vector<8x16xf32>
    %85 = tpu.matmul %77, %71, %cst_27 {dimension_numbers = #tpu.dot_dimension_numbers<[1], [0], [0], [1], [0, 0, 1, 1], [], []>} : vector<8x8xf32>, vector<8x16xf32>, vector<8x16xf32> -> vector<8x16xf32>
    %86 = vector.broadcast %84 : vector<8x1xf32> to vector<8x16xf32>
    %87 = arith.mulf %85, %86 : vector<8x16xf32>
    %88 = tpu.concatenate %24, %45, %66, %87 in 1 : vector<8x16xf32>, vector<8x16xf32>, vector<8x16xf32>, vector<8x16xf32> -> vector<8x64xf32>
    %c0_28 = arith.constant 0 : index
    %c0_29 = arith.constant 0 : index
    %89 = vector.load %arg3[%c0_28, %c0_29] : memref<64x32xf32, #tpu.memory_space<vmem>>, vector<64x32xf32>
    %cst_30 = arith.constant dense<0.000000e+00> : vector<8x32xf32>
    %90 = tpu.matmul %88, %89, %cst_30 {dimension_numbers = #tpu.dot_dimension_numbers<[1], [0], [0], [1], [0, 0, 1, 1], [], []>} : vector<8x64xf32>, vector<64x32xf32>, vector<8x32xf32> -> vector<8x32xf32>
    %c0_31 = arith.constant 0 : index
    %c0_32 = arith.constant 0 : index
    %91 = vector.load %arg4[%c0_31, %c0_32] : memref<1x32xf32, #tpu.memory_space<vmem>>, vector<1x32xf32>
    %92 = vector.broadcast %91 : vector<1x32xf32> to vector<8x32xf32>
    %93 = arith.addf %90, %92 : vector<8x32xf32>
    %94 = vector.shape_cast %93 : vector<8x32xf32> to vector<1x8x32xf32>
    %c0_33 = arith.constant 0 : index
    %c0_34 = arith.constant 0 : index
    %c0_35 = arith.constant 0 : index
    %95 = vector.load %arg5[%c0_33, %c0_34, %c0_35] : memref<1x8x32xf32, #tpu.memory_space<vmem>>, vector<1x8x32xf32>
    tpu.vector_store %arg5[%c0_33, %c0_34, %c0_35], %94 {strides = array<i32>} : memref<1x8x32xf32, #tpu.memory_space<vmem>>, vector<1x8x32xf32>,
    return
  }
  func.func @transform_0(%arg0: i32) -> (i32, i32, i32) {
    %c0_i32 = arith.constant 0 : i32
    %c0_i32_0 = arith.constant 0 : i32
    %c0_i32_1 = arith.constant 0 : i32
    return %arg0, %c0_i32, %c0_i32_0 : i32, i32, i32
  }
  func.func @transform_1(%arg0: i32) -> (i32, i32) {
    %c0_i32 = arith.constant 0 : i32
    %c0_i32_0 = arith.constant 0 : i32
    %c0_i32_1 = arith.constant 0 : i32
    return %c0_i32, %c0_i32_0 : i32, i32
  }
  func.func @transform_2(%arg0: i32) -> (i32, i32) {
    %c0_i32 = arith.constant 0 : i32
    %c0_i32_0 = arith.constant 0 : i32
    %c0_i32_1 = arith.constant 0 : i32
    return %c0_i32, %c0_i32_0 : i32, i32
  }
  func.func @transform_3(%arg0: i32) -> (i32, i32) {
    %c0_i32 = arith.constant 0 : i32
    %c0_i32_0 = arith.constant 0 : i32
    %c0_i32_1 = arith.constant 0 : i32
    return %c0_i32, %c0_i32_0 : i32, i32
  }
  func.func @transform_4(%arg0: i32) -> (i32, i32, i32) {
    %c0_i32 = arith.constant 0 : i32
    %c0_i32_0 = arith.constant 0 : i32
    %c0_i32_1 = arith.constant 0 : i32
    return %arg0, %c0_i32, %c0_i32_0 : i32, i32, i32
  }
}

</mosaic_0001>

<llo_original>
// kernel: tpu_custom_call.1
$region0: #{tpu_custom_call.1}
  #allocation0 [shape = 'u32[]', space=smem, size = 0x4, offset = 0x4, fixed_abs, tag = 'smem constant byte address 0x4 - core index']
  #allocation1 [shape = 'u32[144,128]{1,0:T(1,128)}', space=vmem, size = 0x12000, scoped, tag = 'internal scratch']
  %s0 = inlined_call_operand.vmem [shape: f32[2,8,32], index: 0, kind: input, shape index: {}]
  %s1 = inlined_call_operand.vmem [shape: f32[32,192], index: 1, kind: input, shape index: {}]
  %s2 = inlined_call_operand.vmem [shape: f32[64,32], index: 2, kind: input, shape index: {}]
  %s3 = inlined_call_operand.vmem [shape: f32[1,32], index: 3, kind: input, shape index: {}]
  %s4 = inlined_call_operand.hbm [shape: f32[2,8,32], index: 4, kind: output, shape index: {}]
  %s5 = sld [smem:[#allocation0]]
  $region49: #{tpu_custom_call.1} parent=0
    _
  %s7 = ssub.s32 1, %s5
  %s8 = scalar_select 0, %s7, %s5
  $region1: #{tpu_custom_call.1} parent=0
    #allocation2 [shape = 'u8[8192]{0}', space=vmem, size = 0x2000, scoped, tag = 'output window, operand 0']
    #allocation3 [shape = 's32[2]{0}', space=sflag, size = 0x8, scoped, tag = 'scoped memory for tpu_custom_call.1']
    %9 = vsyncpa [#allocation3], 0
    %s10 = scalar_lea.sflag [#allocation3], 1
    %11 = vsyncpa %s10, 0
    loop: start=0, step=1, limit=4
    $region2: #{tpu_custom_call.1} parent=1 // loop_pre_header
      _
    $region3: #{tpu_custom_call.1} parent=1 // loop_header
      %s13 = sphi 0, %s17
      %p14 = scmp.ge.s32.totalorder %s13, 4
      %s23 = sphi 0, %s25
      %s26 = sphi 0, %s23
      %s27 = sphi 0, %s26
      %s43 = sphi 0, %s27
      %s47 = sphi 0, %s47
      %s49 = sphi 0, %s47
      %s50 = sphi 0, %s49
      %s64 = sphi 0, %s50
      %s68 = sphi 0, %s68
      %s70 = sphi 0, %s68
      %s71 = sphi 0, %s70
      %s85 = sphi 0, %s71
      %s89 = sphi 0, %s89
      %s91 = sphi 0, %s89
      %s92 = sphi 0, %s91
      %s106 = sphi 0, %s92
      %s112 = sphi 0, %s114
      %s115 = sphi 0, %s112
      %s116 = sphi 0, %s115
      %s132 = sphi 0, %s116
    $region4: #{tpu_custom_call.1} parent=1 // loop_header_branch
      %16 = sbr.rel (%p14) target = $region8
    $region5: #{tpu_custom_call.1} parent=1 // loop_body
      %s18 = ssub.s32 %s13, 1
      %s19 = ssub.s32 %s13, 2
      %s20 = sadd.s32 %s13, 1
      %s21 = ssub.s32 %s13, %s20
      %p22 = scmp.eq.s32.totalorder %s21, 0
      %s24 = sadd.s32 %s23, 1
      %s25 = scalar_select %p22, %s23, %s24
      %p28 = pneg %p22
      %p29 = scmp.eq.s32.totalorder %s13, 1
      %p30 = por %p28, %p29
      %p31 = scmp.ne.s32.totalorder %s23, %s26
      %p32 = scmp.eq.s32.totalorder %s13, 0
      %p33 = por %p31, %p32
      %p34 = scmp.ne.s32.totalorder %s23, %s26
      %p35 = scmp.eq.s32.totalorder %s18, 1
      %p36 = por %p34, %p35
      %p37 = scmp.ne.s32.totalorder %s26, %s27
      %p38 = scmp.eq.s32.totalorder %s18, 0
      %p39 = por %p37, %p38
      %p40 = scmp.ne.s32.totalorder %s26, %s27
      %p41 = scmp.eq.s32.totalorder %s19, 1
      %p42 = por %p40, %p41
      %p44 = scmp.ne.s32.totalorder %s27, %s43
      %p45 = scmp.eq.s32.totalorder %s19, 0
      %p46 = por %p44, %p45
      %s48 = sadd.s32 %s47, 1
      %p51 = scmp.eq.s32.totalorder %s13, 1
      %p52 = scmp.ne.s32.totalorder %s47, %s49
      %p53 = scmp.eq.s32.totalorder %s13, 0
      %p54 = por %p52, %p53
      %p55 = scmp.ne.s32.totalorder %s47, %s49
      %p56 = scmp.eq.s32.totalorder %s18, 1
      %p57 = por %p55, %p56
      %p58 = scmp.ne.s32.totalorder %s49, %s50
      %p59 = scmp.eq.s32.totalorder %s18, 0
      %p60 = por %p58, %p59
      %p61 = scmp.ne.s32.totalorder %s49, %s50
      %p62 = scmp.eq.s32.totalorder %s19, 1
      %p63 = por %p61, %p62
      %p65 = scmp.ne.s32.totalorder %s50, %s64
      %p66 = scmp.eq.s32.totalorder %s19, 0
      %p67 = por %p65, %p66
      %s69 = sadd.s32 %s68, 1
      %p72 = scmp.eq.s32.totalorder %s13, 1
      %p73 = scmp.ne.s32.totalorder %s68, %s70
      %p74 = scmp.eq.s32.totalorder %s13, 0
      %p75 = por %p73, %p74
      %p76 = scmp.ne.s32.totalorder %s68, %s70
      %p77 = scmp.eq.s32.totalorder %s18, 1
      %p78 = por %p76, %p77
      %p79 = scmp.ne.s32.totalorder %s70, %s71
      %p80 = scmp.eq.s32.totalorder %s18, 0
      %p81 = por %p79, %p80
      %p82 = scmp.ne.s32.totalorder %s70, %s71
      %p83 = scmp.eq.s32.totalorder %s19, 1
      %p84 = por %p82, %p83
      %p86 = scmp.ne.s32.totalorder %s71, %s85
      %p87 = scmp.eq.s32.totalorder %s19, 0
      %p88 = por %p86, %p87
      %s90 = sadd.s32 %s89, 1
      %p93 = scmp.eq.s32.totalorder %s13, 1
      %p94 = scmp.ne.s32.totalorder %s89, %s91
      %p95 = scmp.eq.s32.totalorder %s13, 0
      %p96 = por %p94, %p95
      %p97 = scmp.ne.s32.totalorder %s89, %s91
      %p98 = scmp.eq.s32.totalorder %s18, 1
      %p99 = por %p97, %p98
      %p100 = scmp.ne.s32.totalorder %s91, %s92
      %p101 = scmp.eq.s32.totalorder %s18, 0
      %p102 = por %p100, %p101
      %p103 = scmp.ne.s32.totalorder %s91, %s92
      %p104 = scmp.eq.s32.totalorder %s19, 1
      %p105 = por %p103, %p104
      %p107 = scmp.ne.s32.totalorder %s92, %s106
      %p108 = scmp.eq.s32.totalorder %s19, 0
      %p109 = por %p107, %p108
      %s110 = ssub.s32 %s13, %s20
      %p111 = scmp.eq.s32.totalorder %s110, 0
      %s113 = sadd.s32 %s112, 1
      %s114 = scalar_select %p111, %s112, %s113
      %p117 = pneg %p111
      %p118 = scmp.eq.s32.totalorder %s13, 1
      %p119 = por %p117, %p118
      %p120 = scmp.ne.s32.totalorder %s112, %s115
      %p121 = scmp.eq.s32.totalorder %s13, 0
      %p122 = por %p120, %p121
      %p123 = scmp.ne.s32.totalorder %s112, %s115
      %p124 = scmp.eq.s32.totalorder %s18, 1
      %p125 = por %p123, %p124
      %p126 = scmp.ne.s32.totalorder %s115, %s116
      %p127 = scmp.eq.s32.totalorder %s18, 0
      %p128 = por %p126, %p127
      %p129 = scmp.ne.s32.totalorder %s115, %s116
      %p130 = scmp.eq.s32.totalorder %s19, 1
      %p131 = por %p129, %p130
      %p133 = scmp.ne.s32.totalorder %s116, %s132
      %p134 = scmp.eq.s32.totalorder %s19, 0
      %p135 = por %p133, %p134
      %p136 = scmp.le.s32.totalorder 1, %s13
      %p137 = scmp.lt.s32.totalorder %s13, 3
      %p138 = pnand %p136, %p137
      %p139 = pneg %p138
      // Predicated region
      $region9: #{tpu_custom_call.1} parent=5 // pred_check
        _
      $region10: #{tpu_custom_call.1} parent=5 // pred_check_branch
        %141 = sbr.rel (%p138) target = $region12
      $region11: #{tpu_custom_call.1} parent=5 // pred_region
        %s142 = ssub.s32 %s13, 1
        // Predicated region
        $region13: #{tpu_custom_call.1} parent=11 // pred_check
          %p143 = pneg %p60
        $region14: #{tpu_custom_call.1} parent=11 // pred_check_branch
          %145 = sbr.rel (%p143) target = $region16
        $region15: #{tpu_custom_call.1} parent=11 // pred_region
          _
        $region16: #{tpu_custom_call.1} parent=11 // pred_fallthru
          _
        // Predicated region
        $region17: #{tpu_custom_call.1} parent=11 // pred_check
          %p146 = pneg %p81
        $region18: #{tpu_custom_call.1} parent=11 // pred_check_branch
          %148 = sbr.rel (%p146) target = $region20
        $region19: #{tpu_custom_call.1} parent=11 // pred_region
          _
        $region20: #{tpu_custom_call.1} parent=11 // pred_fallthru
          _
        // Predicated region
        $region21: #{tpu_custom_call.1} parent=11 // pred_check
          %p149 = pneg %p102
        $region22: #{tpu_custom_call.1} parent=11 // pred_check_branch
          %151 = sbr.rel (%p149) target = $region24
        $region23: #{tpu_custom_call.1} parent=11 // pred_region
          _
        $region24: #{tpu_custom_call.1} parent=11 // pred_fallthru
          _
      $region12: #{tpu_custom_call.1} parent=5 // pred_fallthru
        _
      %p152 = scmp.lt.s32.totalorder %s13, 2
      // Predicated region
      $region25: #{tpu_custom_call.1} parent=5 // pred_check
        %p153 = pneg %p152
      $region26: #{tpu_custom_call.1} parent=5 // pred_check_branch
        %155 = sbr.rel (%p153) target = $region28
      $region27: #{tpu_custom_call.1} parent=5 // pred_region
        // Predicated region
        $region29: #{tpu_custom_call.1} parent=27 // pred_check
          %p156 = pneg %p33
        $region30: #{tpu_custom_call.1} parent=27 // pred_check_branch
          %158 = sbr.rel (%p156) target = $region32
        $region31: #{tpu_custom_call.1} parent=27 // pred_region
          %p159 = scmp.lt.s32.totalorder %s13, 1
          %s160 = scalar_select %p159, %s13, 1
          %s161 = smul.addr %s160, 8
          %s162 = scalar_lea.vmem %s0, %s161
        $region32: #{tpu_custom_call.1} parent=27 // pred_fallthru
          _
      $region28: #{tpu_custom_call.1} parent=5 // pred_fallthru
        _
      %p163 = scmp.le.s32.totalorder 1, %s13
      %p164 = scmp.lt.s32.totalorder %s13, 3
      %p165 = pnand %p163, %p164
      %p166 = pneg %p165
      // Predicated region
      $region33: #{tpu_custom_call.1} parent=5 // pred_check
        _
      $region34: #{tpu_custom_call.1} parent=5 // pred_check_branch
        %168 = sbr.rel (%p165) target = $region36
      $region35: #{tpu_custom_call.1} parent=5 // pred_region
        %s169 = ssub.s32 %s13, 1
        %p170 = scmp.lt.s32.totalorder %s18, 1
        %s171 = scalar_select %p170, %s18, 1
        %s172 = smul.addr %s171, 8
        %s173 = scalar_lea.vmem %s0, %s172
        %p174 = pneg %p39
        %p175 = pneg %p36
        %p176 = pneg %p60
        %p177 = pneg %p57
        %p178 = pneg %p81
        %p179 = pneg %p78
        %p180 = pneg %p102
        %p181 = pneg %p99
        %p182 = pneg %p128
        %p183 = pneg %p125
        %s184 = sand.u32 %s115, 1
        %s185 = scalar_lea.sflag [#allocation3], %s184
        %s186 = sand.u32 %s115, 1
        %s187 = smul.addr %s186, 8
        %s188 = scalar_lea.vmem [#allocation2], %s187
        %p189 = scmp.lt.s32.totalorder %s18, 1
        %s190 = scalar_select %p189, %s18, 1
        %s191 = smul.addr %s190, 8
        %s192 = scalar_lea.vmem %s0, %s191
        %v193 = vld [vmem:[%s192] sm:$0xff]
        %v194 = vld [vmem:[%s1] sm:$0xff]
        %v195 = vld [vmem:[%s1 + $0x8] sm:$0xff]
        %v196 = vld [vmem:[%s1 + $0x10] sm:$0xff]
        %v197 = vld [vmem:[%s1 + $0x18] sm:$0xff]
        %v198 = vld [vmem:[%s1 + $0x20] sm:$0xff]
        %v199 = vld [vmem:[%s1 + $0x28] sm:$0xff]
        %v200 = vld [vmem:[%s1 + $0x30] sm:$0xff]
        %v201 = vld [vmem:[%s1 + $0x38] sm:$0xff]
        %vm202 = vcmask 261120
        %v204 = vsel %vm202, %v193, 0
        %206 = vmatprep.subr.mxu0 %v195
        %207 = vmatpush1.msra.mxu0 %v194
        %208 = vmatprep.subr.mxu0 %v197
        %209 = vmatpush1.msra.mxu0 %v196
        %210 = vmatprep.subr.mxu0 %v199
        %211 = vmatpush1.msra.mxu0 %v198
        %212 = vmatprep.subr.mxu0 %v201
        %213 = vmatpush1.msra.mxu0 %v200
        %214 = vmatprep.subr.mxu0 0.0
        %215 = vmatpush1.msra.mxu0 0.0
        %216 = vmatprep.subr.mxu0 0.0
        %217 = vmatpush1.msra.mxu0 0.0
        %218 = vmatprep.subr.mxu0 0.0
        %219 = vmatpush1.msra.mxu0 0.0
        %220 = vmatprep.subr.mxu0 0.0
        %221 = vmatpush1.msra.mxu0 0.0
        %222 = vmatprep.subr.mxu0 0.0
        %223 = vmatpush1.msra.mxu0 0.0
        %224 = vmatprep.subr.mxu0 0.0
        %225 = vmatpush1.msra.mxu0 0.0
        %226 = vmatprep.subr.mxu0 0.0
        %227 = vmatpush1.msra.mxu0 0.0
        %228 = vmatprep.subr.mxu0 0.0
        %229 = vmatpush1.msra.mxu0 0.0
        %230 = vmatprep.subr.mxu0 0.0
        %231 = vmatpush1.msra.mxu0 0.0
        %232 = vmatprep.subr.mxu0 0.0
        %233 = vmatpush1.msra.mxu0 0.0
        %234 = vmatprep.subr.mxu0 0.0
        %235 = vmatpush1.msra.mxu0 0.0
        %236 = vmatprep.subr.mxu0 0.0
        %237 = vmatpush1.msra.mxu0 0.0
        %238 = vmatprep.subr.mxu0 0.0
        %239 = vmatpush1.msra.mxu0 0.0
        %240 = vmatprep.subr.mxu0 0.0
        %241 = vmatpush1.msra.mxu0 0.0
        %242 = vmatprep.subr.mxu0 0.0
        %243 = vmatpush1.msra.mxu0 0.0
        %244 = vmatprep.subr.mxu0 0.0
        %245 = vmatpush1.msra.mxu0 0.0
        %246 = vmatprep.subr.mxu0 0.0
        %247 = vmatpush1.msra.mxu0 0.0
        %248 = vmatprep.subr.mxu0 0.0
        %249 = vmatpush1.msra.mxu0 0.0
        %250 = vmatprep.subr.mxu0 0.0
        %251 = vmatpush1.msra.mxu0 0.0
        %252 = vmatprep.subr.mxu0 0.0
        %253 = vmatpush1.msra.mxu0 0.0
        %254 = vmatprep.subr.mxu0 0.0
        %255 = vmatpush1.msra.mxu0 0.0
        %256 = vmatprep.subr.mxu0 0.0
        %257 = vmatpush1.msra.mxu0 0.0
        %258 = vmatprep.subr.mxu0 0.0
        %259 = vmatpush1.msra.mxu0 0.0
        %260 = vmatprep.subr.mxu0 0.0
        %261 = vmatpush1.msra.mxu0 0.0
        %262 = vmatprep.subr.mxu0 0.0
        %263 = vmatpush1.msra.mxu0 0.0
        %264 = vmatprep.subr.mxu0 0.0
        %265 = vmatpush1.msra.mxu0 0.0
        %266 = vmatprep.subr.mxu0 0.0
        %267 = vmatpush1.msra.mxu0 0.0
        %268 = vmatprep.subr.mxu0 0.0
        %269 = vmatpush1.msra.mxu0 0.0
        %270 = vmatprep.mubr.f32.mxu0 0.0
        %271 = vmatmul.mubr.f32.gmra.mrb[0].mxu0 %v204
        %v272 = vpop.f32.mrb[0].mxu0
        %v273 = vadd.f32 0.0, %v272
        %v274 = vpop.f32.mrb[0].mxu0
        %v275 = vadd.f32 0.0, %v274
        %276 = vdwg.mxu0
        %v277 = vmul.f32 %v273, 0.25
        %279 = vrot.lane.b32.xlu0 %v273, 64
        %v280 = vpop.permute.xlu0 %279
        %vm281 = vcmask 130048
        %v283 = vsel %vm281, %v277, 0
        %v285 = vsel %vm281, %v280, 0
        %287 = vmatprep.subr.mxu0 0.0
        %288 = vmatpush1.xpose.msra.mxu0 %v285
        %289 = vmatprep.subr.mxu0 0.0
        %290 = vmatpush1.xpose.msra.mxu0 0.0
        %291 = vmatprep.subr.mxu0 0.0
        %292 = vmatpush1.xpose.msra.mxu0 0.0
        %293 = vmatprep.subr.mxu0 0.0
        %294 = vmatpush1.xpose.msra.mxu0 0.0
        %295 = vmatprep.subr.mxu0 0.0
        %296 = vmatpush1.xpose.msra.mxu0 0.0
        %297 = vmatprep.subr.mxu0 0.0
        %298 = vmatpush1.xpose.msra.mxu0 0.0
        %299 = vmatprep.subr.mxu0 0.0
        %300 = vmatpush1.xpose.msra.mxu0 0.0
        %301 = vmatprep.subr.mxu0 0.0
        %302 = vmatpush1.xpose.msra.mxu0 0.0
        %303 = vmatprep.subr.mxu0 0.0
        %304 = vmatpush1.xpose.msra.mxu0 0.0
        %305 = vmatprep.subr.mxu0 0.0
        %306 = vmatpush1.xpose.msra.mxu0 0.0
        %307 = vmatprep.subr.mxu0 0.0
        %308 = vmatpush1.xpose.msra.mxu0 0.0
        %309 = vmatprep.subr.mxu0 0.0
        %310 = vmatpush1.xpose.msra.mxu0 0.0
        %311 = vmatprep.subr.mxu0 0.0
        %312 = vmatpush1.xpose.msra.mxu0 0.0
        %313 = vmatprep.subr.mxu0 0.0
        %314 = vmatpush1.xpose.msra.mxu0 0.0
        %315 = vmatprep.subr.mxu0 0.0
        %316 = vmatpush1.xpose.msra.mxu0 0.0
        %317 = vmatprep.subr.mxu0 0.0
        %318 = vmatpush1.xpose.msra.mxu0 0.0
        %319 = vmatprep.subr.mxu0 0.0
        %320 = vmatpush1.xpose.msra.mxu0 0.0
        %321 = vmatprep.subr.mxu0 0.0
        %322 = vmatpush1.xpose.msra.mxu0 0.0
        %323 = vmatprep.subr.mxu0 0.0
        %324 = vmatpush1.xpose.msra.mxu0 0.0
        %325 = vmatprep.subr.mxu0 0.0
        %326 = vmatpush1.xpose.msra.mxu0 0.0
        %327 = vmatprep.subr.mxu0 0.0
        %328 = vmatpush1.xpose.msra.mxu0 0.0
        %329 = vmatprep.subr.mxu0 0.0
        %330 = vmatpush1.xpose.msra.mxu0 0.0
        %331 = vmatprep.subr.mxu0 0.0
        %332 = vmatpush1.xpose.msra.mxu0 0.0
        %333 = vmatprep.subr.mxu0 0.0
        %334 = vmatpush1.xpose.msra.mxu0 0.0
        %335 = vmatprep.subr.mxu0 0.0
        %336 = vmatpush1.xpose.msra.mxu0 0.0
        %337 = vmatprep.subr.mxu0 0.0
        %338 = vmatpush1.xpose.msra.mxu0 0.0
        %339 = vmatprep.subr.mxu0 0.0
        %340 = vmatpush1.xpose.msra.mxu0 0.0
        %341 = vmatprep.subr.mxu0 0.0
        %342 = vmatpush1.xpose.msra.mxu0 0.0
        %343 = vmatprep.subr.mxu0 0.0
        %344 = vmatpush1.xpose.msra.mxu0 0.0
        %345 = vmatprep.subr.mxu0 0.0
        %346 = vmatpush1.xpose.msra.mxu0 0.0
        %347 = vmatprep.subr.mxu0 0.0
        %348 = vmatpush1.xpose.msra.mxu0 0.0
        %349 = vmatprep.subr.mxu0 0.0
        %350 = vmatpush1.xpose.msra.mxu0 0.0
        %351 = vmatprep.mubr.f32.mxu0 0.0
        %352 = vmatmul.mubr.f32.gmra.mrb[0].mxu0 %v283
        %v353 = vpop.f32.mrb[0].mxu0
        %v354 = vadd.f32 0.0, %v353
        %v355 = vpop.f32.mrb[0].mxu0
        %356 = vdwg.mxu0
        %vm357 = vcmask 64512
        %v358 = vsel %vm357, %v354, -inf
        %359 = vmax.xlane.f32.xlu0 %v358
        %v360 = vpop.xlane.xlu0 %359
        %v361 = vsub.f32 %v354, %v360
        %v362 = vmul.f32 %v361, 1.442695
        %v363 = vpow.pop %v362
        %v364 = vsel %vm357, %v363, 0.0
        %365 = vadd.xlane.f32.xlu0 %v364
        %v366 = vpop.xlane.xlu0 %365
        %v367 = vrcp.pop %v366
        %v368 = vmul.f32 %v366, %v367
        %v369 = vsub.f32 2.0, %v368
        %v370 = vmul.f32 %v367, %v369
        %v372 = vsel %vm357, %v363, 0
        %374 = vmatprep.subr.mxu0 0.0
        %375 = vmatpush1.msra.mxu0 %v275
        %376 = vmatprep.subr.mxu0 0.0
        %377 = vmatpush1.msra.mxu0 0.0
        %378 = vmatprep.subr.mxu0 0.0
        %379 = vmatpush1.msra.mxu0 0.0
        %380 = vmatprep.subr.mxu0 0.0
        %381 = vmatpush1.msra.mxu0 0.0
        %382 = vmatprep.subr.mxu0 0.0
        %383 = vmatpush1.msra.mxu0 0.0
        %384 = vmatprep.subr.mxu0 0.0
        %385 = vmatpush1.msra.mxu0 0.0
        %386 = vmatprep.subr.mxu0 0.0
        %387 = vmatpush1.msra.mxu0 0.0
        %388 = vmatprep.subr.mxu0 0.0
        %389 = vmatpush1.msra.mxu0 0.0
        %390 = vmatprep.subr.mxu0 0.0
        %391 = vmatpush1.msra.mxu0 0.0
        %392 = vmatprep.subr.mxu0 0.0
        %393 = vmatpush1.msra.mxu0 0.0
        %394 = vmatprep.subr.mxu0 0.0
        %395 = vmatpush1.msra.mxu0 0.0
        %396 = vmatprep.subr.mxu0 0.0
        %397 = vmatpush1.msra.mxu0 0.0
        %398 = vmatprep.subr.mxu0 0.0
        %399 = vmatpush1.msra.mxu0 0.0
        %400 = vmatprep.subr.mxu0 0.0
        %401 = vmatpush1.msra.mxu0 0.0
        %402 = vmatprep.subr.mxu0 0.0
        %403 = vmatpush1.msra.mxu0 0.0
        %404 = vmatprep.subr.mxu0 0.0
        %405 = vmatpush1.msra.mxu0 0.0
        %406 = vmatprep.subr.mxu0 0.0
        %407 = vmatpush1.msra.mxu0 0.0
        %408 = vmatprep.subr.mxu0 0.0
        %409 = vmatpush1.msra.mxu0 0.0
        %410 = vmatprep.subr.mxu0 0.0
        %411 = vmatpush1.msra.mxu0 0.0
        %412 = vmatprep.subr.mxu0 0.0
        %413 = vmatpush1.msra.mxu0 0.0
        %414 = vmatprep.subr.mxu0 0.0
        %415 = vmatpush1.msra.mxu0 0.0
        %416 = vmatprep.subr.mxu0 0.0
        %417 = vmatpush1.msra.mxu0 0.0
        %418 = vmatprep.subr.mxu0 0.0
        %419 = vmatpush1.msra.mxu0 0.0
        %420 = vmatprep.subr.mxu0 0.0
        %421 = vmatpush1.msra.mxu0 0.0
        %422 = vmatprep.subr.mxu0 0.0
        %423 = vmatpush1.msra.mxu0 0.0
        %424 = vmatprep.subr.mxu0 0.0
        %425 = vmatpush1.msra.mxu0 0.0
        %426 = vmatprep.subr.mxu0 0.0
        %427 = vmatpush1.msra.mxu0 0.0
        %428 = vmatprep.subr.mxu0 0.0
        %429 = vmatpush1.msra.mxu0 0.0
        %430 = vmatprep.subr.mxu0 0.0
        %431 = vmatpush1.msra.mxu0 0.0
        %432 = vmatprep.subr.mxu0 0.0
        %433 = vmatpush1.msra.mxu0 0.0
        %434 = vmatprep.subr.mxu0 0.0
        %435 = vmatpush1.msra.mxu0 0.0
        %436 = vmatprep.subr.mxu0 0.0
        %437 = vmatpush1.msra.mxu0 0.0
        %438 = vmatprep.mubr.f32.mxu0 0.0
        %439 = vmatmul.mubr.f32.gmra.mrb[0].mxu0 %v372
        %v440 = vpop.f32.mrb[0].mxu0
        %v441 = vadd.f32 0.0, %v440
        %v442 = vpop.f32.mrb[0].mxu0
        %443 = vdwg.mxu0
        %v444 = vmul.f32 %v441, %v370
        %445 = vrot.lane.b32.xlu0 %v277, 112
        %v446 = vpop.permute.xlu0 %445
        %447 = vrot.lane.b32.xlu0 %v273, 48
        %v448 = vpop.permute.xlu0 %447
        %v449 = vsel %vm281, %v446, 0
        %v451 = vsel %vm281, %v448, 0
        %453 = vmatprep.subr.mxu0 0.0
        %454 = vmatpush1.xpose.msra.mxu0 %v451
        %455 = vmatprep.subr.mxu0 0.0
        %456 = vmatpush1.xpose.msra.mxu0 0.0
        %457 = vmatprep.subr.mxu0 0.0
        %458 = vmatpush1.xpose.msra.mxu0 0.0
        %459 = vmatprep.subr.mxu0 0.0
        %460 = vmatpush1.xpose.msra.mxu0 0.0
        %461 = vmatprep.subr.mxu0 0.0
        %462 = vmatpush1.xpose.msra.mxu0 0.0
        %463 = vmatprep.subr.mxu0 0.0
        %464 = vmatpush1.xpose.msra.mxu0 0.0
        %465 = vmatprep.subr.mxu0 0.0
        %466 = vmatpush1.xpose.msra.mxu0 0.0
        %467 = vmatprep.subr.mxu0 0.0
        %468 = vmatpush1.xpose.msra.mxu0 0.0
        %469 = vmatprep.subr.mxu0 0.0
        %470 = vmatpush1.xpose.msra.mxu0 0.0
        %471 = vmatprep.subr.mxu0 0.0
        %472 = vmatpush1.xpose.msra.mxu0 0.0
        %473 = vmatprep.subr.mxu0 0.0
        %474 = vmatpush1.xpose.msra.mxu0 0.0
        %475 = vmatprep.subr.mxu0 0.0
        %476 = vmatpush1.xpose.msra.mxu0 0.0
        %477 = vmatprep.subr.mxu0 0.0
        %478 = vmatpush1.xpose.msra.mxu0 0.0
        %479 = vmatprep.subr.mxu0 0.0
        %480 = vmatpush1.xpose.msra.mxu0 0.0
        %481 = vmatprep.subr.mxu0 0.0
        %482 = vmatpush1.xpose.msra.mxu0 0.0
        %483 = vmatprep.subr.mxu0 0.0
        %484 = vmatpush1.xpose.msra.mxu0 0.0
        %485 = vmatprep.subr.mxu0 0.0
        %486 = vmatpush1.xpose.msra.mxu0 0.0
        %487 = vmatprep.subr.mxu0 0.0
        %488 = vmatpush1.xpose.msra.mxu0 0.0
        %489 = vmatprep.subr.mxu0 0.0
        %490 = vmatpush1.xpose.msra.mxu0 0.0
        %491 = vmatprep.subr.mxu0 0.0
        %492 = vmatpush1.xpose.msra.mxu0 0.0
        %493 = vmatprep.subr.mxu0 0.0
        %494 = vmatpush1.xpose.msra.mxu0 0.0
        %495 = vmatprep.subr.mxu0 0.0
        %496 = vmatpush1.xpose.msra.mxu0 0.0
        %497 = vmatprep.subr.mxu0 0.0
        %498 = vmatpush1.xpose.msra.mxu0 0.0
        %499 = vmatprep.subr.mxu0 0.0
        %500 = vmatpush1.xpose.msra.mxu0 0.0
        %501 = vmatprep.subr.mxu0 0.0
        %502 = vmatpush1.xpose.msra.mxu0 0.0
        %503 = vmatprep.subr.mxu0 0.0
        %504 = vmatpush1.xpose.msra.mxu0 0.0
        %505 = vmatprep.subr.mxu0 0.0
        %506 = vmatpush1.xpose.msra.mxu0 0.0
        %507 = vmatprep.subr.mxu0 0.0
        %508 = vmatpush1.xpose.msra.mxu0 0.0
        %509 = vmatprep.subr.mxu0 0.0
        %510 = vmatpush1.xpose.msra.mxu0 0.0
        %511 = vmatprep.subr.mxu0 0.0
        %512 = vmatpush1.xpose.msra.mxu0 0.0
        %513 = vmatprep.subr.mxu0 0.0
        %514 = vmatpush1.xpose.msra.mxu0 0.0
        %515 = vmatprep.subr.mxu0 0.0
        %516 = vmatpush1.xpose.msra.mxu0 0.0
        %517 = vmatprep.mubr.f32.mxu0 0.0
        %518 = vmatmul.mubr.f32.gmra.mrb[0].mxu0 %v449
        %v519 = vpop.f32.mrb[0].mxu0
        %v520 = vadd.f32 0.0, %v519
        %v521 = vpop.f32.mrb[0].mxu0
        %522 = vdwg.mxu0
        %v523 = vsel %vm357, %v520, -inf
        %524 = vmax.xlane.f32.xlu0 %v523
        %v525 = vpop.xlane.xlu0 %524
        %v526 = vsub.f32 %v520, %v525
        %v527 = vmul.f32 %v526, 1.442695
        %v528 = vpow.pop %v527
        %v529 = vsel %vm357, %v528, 0.0
        %530 = vadd.xlane.f32.xlu0 %v529
        %v531 = vpop.xlane.xlu0 %530
        %v532 = vrcp.pop %v531
        %v533 = vmul.f32 %v531, %v532
        %v534 = vsub.f32 2.0, %v533
        %v535 = vmul.f32 %v532, %v534
        %537 = vrot.lane.b32.xlu0 %v275, 112
        %v538 = vpop.permute.xlu0 %537
        %v541 = vsel %vm357, %v528, 0
        %543 = vmatprep.subr.mxu0 0.0
        %544 = vmatpush1.msra.mxu0 %v538
        %545 = vmatprep.subr.mxu0 0.0
        %546 = vmatpush1.msra.mxu0 0.0
        %547 = vmatprep.subr.mxu0 0.0
        %548 = vmatpush1.msra.mxu0 0.0
        %549 = vmatprep.subr.mxu0 0.0
        %550 = vmatpush1.msra.mxu0 0.0
        %551 = vmatprep.subr.mxu0 0.0
        %552 = vmatpush1.msra.mxu0 0.0
        %553 = vmatprep.subr.mxu0 0.0
        %554 = vmatpush1.msra.mxu0 0.0
        %555 = vmatprep.subr.mxu0 0.0
        %556 = vmatpush1.msra.mxu0 0.0
        %557 = vmatprep.subr.mxu0 0.0
        %558 = vmatpush1.msra.mxu0 0.0
        %559 = vmatprep.subr.mxu0 0.0
        %560 = vmatpush1.msra.mxu0 0.0
        %561 = vmatprep.subr.mxu0 0.0
        %562 = vmatpush1.msra.mxu0 0.0
        %563 = vmatprep.subr.mxu0 0.0
        %564 = vmatpush1.msra.mxu0 0.0
        %565 = vmatprep.subr.mxu0 0.0
        %566 = vmatpush1.msra.mxu0 0.0
        %567 = vmatprep.subr.mxu0 0.0
        %568 = vmatpush1.msra.mxu0 0.0
        %569 = vmatprep.subr.mxu0 0.0
        %570 = vmatpush1.msra.mxu0 0.0
        %571 = vmatprep.subr.mxu0 0.0
        %572 = vmatpush1.msra.mxu0 0.0
        %573 = vmatprep.subr.mxu0 0.0
        %574 = vmatpush1.msra.mxu0 0.0
        %575 = vmatprep.subr.mxu0 0.0
        %576 = vmatpush1.msra.mxu0 0.0
        %577 = vmatprep.subr.mxu0 0.0
        %578 = vmatpush1.msra.mxu0 0.0
        %579 = vmatprep.subr.mxu0 0.0
        %580 = vmatpush1.msra.mxu0 0.0
        %581 = vmatprep.subr.mxu0 0.0
        %582 = vmatpush1.msra.mxu0 0.0
        %583 = vmatprep.subr.mxu0 0.0
        %584 = vmatpush1.msra.mxu0 0.0
        %585 = vmatprep.subr.mxu0 0.0
        %586 = vmatpush1.msra.mxu0 0.0
        %587 = vmatprep.subr.mxu0 0.0
        %588 = vmatpush1.msra.mxu0 0.0
        %589 = vmatprep.subr.mxu0 0.0
        %590 = vmatpush1.msra.mxu0 0.0
        %591 = vmatprep.subr.mxu0 0.0
        %592 = vmatpush1.msra.mxu0 0.0
        %593 = vmatprep.subr.mxu0 0.0
        %594 = vmatpush1.msra.mxu0 0.0
        %595 = vmatprep.subr.mxu0 0.0
        %596 = vmatpush1.msra.mxu0 0.0
        %597 = vmatprep.subr.mxu0 0.0
        %598 = vmatpush1.msra.mxu0 0.0
        %599 = vmatprep.subr.mxu0 0.0
        %600 = vmatpush1.msra.mxu0 0.0
        %601 = vmatprep.subr.mxu0 0.0
        %602 = vmatpush1.msra.mxu0 0.0
        %603 = vmatprep.subr.mxu0 0.0
        %604 = vmatpush1.msra.mxu0 0.0
        %605 = vmatprep.subr.mxu0 0.0
        %606 = vmatpush1.msra.mxu0 0.0
        %607 = vmatprep.mubr.f32.mxu0 0.0
        %608 = vmatmul.mubr.f32.gmra.mrb[0].mxu0 %v541
        %v609 = vpop.f32.mrb[0].mxu0
        %v610 = vadd.f32 0.0, %v609
        %v611 = vpop.f32.mrb[0].mxu0
        %612 = vdwg.mxu0
        %v613 = vmul.f32 %v610, %v535
        %614 = vrot.lane.b32.xlu0 %v277, 96
        %v615 = vpop.permute.xlu0 %614
        %616 = vrot.lane.b32.xlu0 %v273, 32
        %v617 = vpop.permute.xlu0 %616
        %v618 = vsel %vm281, %v615, 0
        %v620 = vsel %vm281, %v617, 0
        %622 = vmatprep.subr.mxu0 0.0
        %623 = vmatpush1.xpose.msra.mxu0 %v620
        %624 = vmatprep.subr.mxu0 0.0
        %625 = vmatpush1.xpose.msra.mxu0 0.0
        %626 = vmatprep.subr.mxu0 0.0
        %627 = vmatpush1.xpose.msra.mxu0 0.0
        %628 = vmatprep.subr.mxu0 0.0
        %629 = vmatpush1.xpose.msra.mxu0 0.0
        %630 = vmatprep.subr.mxu0 0.0
        %631 = vmatpush1.xpose.msra.mxu0 0.0
        %632 = vmatprep.subr.mxu0 0.0
        %633 = vmatpush1.xpose.msra.mxu0 0.0
        %634 = vmatprep.subr.mxu0 0.0
        %635 = vmatpush1.xpose.msra.mxu0 0.0
        %636 = vmatprep.subr.mxu0 0.0
        %637 = vmatpush1.xpose.msra.mxu0 0.0
        %638 = vmatprep.subr.mxu0 0.0
        %639 = vmatpush1.xpose.msra.mxu0 0.0
        %640 = vmatprep.subr.mxu0 0.0
        %641 = vmatpush1.xpose.msra.mxu0 0.0
        %642 = vmatprep.subr.mxu0 0.0
        %643 = vmatpush1.xpose.msra.mxu0 0.0
        %644 = vmatprep.subr.mxu0 0.0
        %645 = vmatpush1.xpose.msra.mxu0 0.0
        %646 = vmatprep.subr.mxu0 0.0
        %647 = vmatpush1.xpose.msra.mxu0 0.0
        %648 = vmatprep.subr.mxu0 0.0
        %649 = vmatpush1.xpose.msra.mxu0 0.0
        %650 = vmatprep.subr.mxu0 0.0
        %651 = vmatpush1.xpose.msra.mxu0 0.0
        %652 = vmatprep.subr.mxu0 0.0
        %653 = vmatpush1.xpose.msra.mxu0 0.0
        %654 = vmatprep.subr.mxu0 0.0
        %655 = vmatpush1.xpose.msra.mxu0 0.0
        %656 = vmatprep.subr.mxu0 0.0
        %657 = vmatpush1.xpose.msra.mxu0 0.0
        %658 = vmatprep.subr.mxu0 0.0
        %659 = vmatpush1.xpose.msra.mxu0 0.0
        %660 = vmatprep.subr.mxu0 0.0
        %661 = vmatpush1.xpose.msra.mxu0 0.0
        %662 = vmatprep.subr.mxu0 0.0
        %663 = vmatpush1.xpose.msra.mxu0 0.0
        %664 = vmatprep.subr.mxu0 0.0
        %665 = vmatpush1.xpose.msra.mxu0 0.0
        %666 = vmatprep.subr.mxu0 0.0
        %667 = vmatpush1.xpose.msra.mxu0 0.0
        %668 = vmatprep.subr.mxu0 0.0
        %669 = vmatpush1.xpose.msra.mxu0 0.0
        %670 = vmatprep.subr.mxu0 0.0
        %671 = vmatpush1.xpose.msra.mxu0 0.0
        %672 = vmatprep.subr.mxu0 0.0
        %673 = vmatpush1.xpose.msra.mxu0 0.0
        %674 = vmatprep.subr.mxu0 0.0
        %675 = vmatpush1.xpose.msra.mxu0 0.0
        %676 = vmatprep.subr.mxu0 0.0
        %677 = vmatpush1.xpose.msra.mxu0 0.0
        %678 = vmatprep.subr.mxu0 0.0
        %679 = vmatpush1.xpose.msra.mxu0 0.0
        %680 = vmatprep.subr.mxu0 0.0
        %681 = vmatpush1.xpose.msra.mxu0 0.0
        %682 = vmatprep.subr.mxu0 0.0
        %683 = vmatpush1.xpose.msra.mxu0 0.0
        %684 = vmatprep.subr.mxu0 0.0
        %685 = vmatpush1.xpose.msra.mxu0 0.0
        %686 = vmatprep.mubr.f32.mxu0 0.0
        %687 = vmatmul.mubr.f32.gmra.mrb[0].mxu0 %v618
        %v688 = vpop.f32.mrb[0].mxu0
        %v689 = vadd.f32 0.0, %v688
        %v690 = vpop.f32.mrb[0].mxu0
        %691 = vdwg.mxu0
        %v692 = vsel %vm357, %v689, -inf
        %693 = vmax.xlane.f32.xlu0 %v692
        %v694 = vpop.xlane.xlu0 %693
        %v695 = vsub.f32 %v689, %v694
        %v696 = vmul.f32 %v695, 1.442695
        %v697 = vpow.pop %v696
        %v698 = vsel %vm357, %v697, 0.0
        %699 = vadd.xlane.f32.xlu0 %v698
        %v700 = vpop.xlane.xlu0 %699
        %v701 = vrcp.pop %v700
        %v702 = vmul.f32 %v700, %v701
        %v703 = vsub.f32 2.0, %v702
        %v704 = vmul.f32 %v701, %v703
        %705 = vrot.lane.b32.xlu0 %v275, 96
        %v706 = vpop.permute.xlu0 %705
        %v709 = vsel %vm357, %v697, 0
        %711 = vmatprep.subr.mxu0 0.0
        %712 = vmatpush1.msra.mxu0 %v706
        %713 = vmatprep.subr.mxu0 0.0
        %714 = vmatpush1.msra.mxu0 0.0
        %715 = vmatprep.subr.mxu0 0.0
        %716 = vmatpush1.msra.mxu0 0.0
        %717 = vmatprep.subr.mxu0 0.0
        %718 = vmatpush1.msra.mxu0 0.0
        %719 = vmatprep.subr.mxu0 0.0
        %720 = vmatpush1.msra.mxu0 0.0
        %721 = vmatprep.subr.mxu0 0.0
        %722 = vmatpush1.msra.mxu0 0.0
        %723 = vmatprep.subr.mxu0 0.0
        %724 = vmatpush1.msra.mxu0 0.0
        %725 = vmatprep.subr.mxu0 0.0
        %726 = vmatpush1.msra.mxu0 0.0
        %727 = vmatprep.subr.mxu0 0.0
        %728 = vmatpush1.msra.mxu0 0.0
        %729 = vmatprep.subr.mxu0 0.0
        %730 = vmatpush1.msra.mxu0 0.0
        %731 = vmatprep.subr.mxu0 0.0
        %732 = vmatpush1.msra.mxu0 0.0
        %733 = vmatprep.subr.mxu0 0.0
        %734 = vmatpush1.msra.mxu0 0.0
        %735 = vmatprep.subr.mxu0 0.0
        %736 = vmatpush1.msra.mxu0 0.0
        %737 = vmatprep.subr.mxu0 0.0
        %738 = vmatpush1.msra.mxu0 0.0
        %739 = vmatprep.subr.mxu0 0.0
        %740 = vmatpush1.msra.mxu0 0.0
        %741 = vmatprep.subr.mxu0 0.0
        %742 = vmatpush1.msra.mxu0 0.0
        %743 = vmatprep.subr.mxu0 0.0
        %744 = vmatpush1.msra.mxu0 0.0
        %745 = vmatprep.subr.mxu0 0.0
        %746 = vmatpush1.msra.mxu0 0.0
        %747 = vmatprep.subr.mxu0 0.0
        %748 = vmatpush1.msra.mxu0 0.0
        %749 = vmatprep.subr.mxu0 0.0
        %750 = vmatpush1.msra.mxu0 0.0
        %751 = vmatprep.subr.mxu0 0.0
        %752 = vmatpush1.msra.mxu0 0.0
        %753 = vmatprep.subr.mxu0 0.0
        %754 = vmatpush1.msra.mxu0 0.0
        %755 = vmatprep.subr.mxu0 0.0
        %756 = vmatpush1.msra.mxu0 0.0
        %757 = vmatprep.subr.mxu0 0.0
        %758 = vmatpush1.msra.mxu0 0.0
        %759 = vmatprep.subr.mxu0 0.0
        %760 = vmatpush1.msra.mxu0 0.0
        %761 = vmatprep.subr.mxu0 0.0
        %762 = vmatpush1.msra.mxu0 0.0
        %763 = vmatprep.subr.mxu0 0.0
        %764 = vmatpush1.msra.mxu0 0.0
        %765 = vmatprep.subr.mxu0 0.0
        %766 = vmatpush1.msra.mxu0 0.0
        %767 = vmatprep.subr.mxu0 0.0
        %768 = vmatpush1.msra.mxu0 0.0
        %769 = vmatprep.subr.mxu0 0.0
        %770 = vmatpush1.msra.mxu0 0.0
        %771 = vmatprep.subr.mxu0 0.0
        %772 = vmatpush1.msra.mxu0 0.0
        %773 = vmatprep.subr.mxu0 0.0
        %774 = vmatpush1.msra.mxu0 0.0
        %775 = vmatprep.mubr.f32.mxu0 0.0
        %776 = vmatmul.mubr.f32.gmra.mrb[0].mxu0 %v709
        %v777 = vpop.f32.mrb[0].mxu0
        %v778 = vadd.f32 0.0, %v777
        %v779 = vpop.f32.mrb[0].mxu0
        %780 = vdwg.mxu0
        %v781 = vmul.f32 %v778, %v704
        %782 = vrot.lane.b32.xlu0 %v277, 80
        %v783 = vpop.permute.xlu0 %782
        %784 = vrot.lane.b32.xlu0 %v273, 16
        %v785 = vpop.permute.xlu0 %784
        %v786 = vsel %vm281, %v783, 0
        %v788 = vsel %vm281, %v785, 0
        %790 = vmatprep.subr.mxu0 0.0
        %791 = vmatpush1.xpose.msra.mxu0 %v788
        %792 = vmatprep.subr.mxu0 0.0
        %793 = vmatpush1.xpose.msra.mxu0 0.0
        %794 = vmatprep.subr.mxu0 0.0
        %795 = vmatpush1.xpose.msra.mxu0 0.0
        %796 = vmatprep.subr.mxu0 0.0
        %797 = vmatpush1.xpose.msra.mxu0 0.0
        %798 = vmatprep.subr.mxu0 0.0
        %799 = vmatpush1.xpose.msra.mxu0 0.0
        %800 = vmatprep.subr.mxu0 0.0
        %801 = vmatpush1.xpose.msra.mxu0 0.0
        %802 = vmatprep.subr.mxu0 0.0
        %803 = vmatpush1.xpose.msra.mxu0 0.0
        %804 = vmatprep.subr.mxu0 0.0
        %805 = vmatpush1.xpose.msra.mxu0 0.0
        %806 = vmatprep.subr.mxu0 0.0
        %807 = vmatpush1.xpose.msra.mxu0 0.0
        %808 = vmatprep.subr.mxu0 0.0
        %809 = vmatpush1.xpose.msra.mxu0 0.0
        %810 = vmatprep.subr.mxu0 0.0
        %811 = vmatpush1.xpose.msra.mxu0 0.0
        %812 = vmatprep.subr.mxu0 0.0
        %813 = vmatpush1.xpose.msra.mxu0 0.0
        %814 = vmatprep.subr.mxu0 0.0
        %815 = vmatpush1.xpose.msra.mxu0 0.0
        %816 = vmatprep.subr.mxu0 0.0
        %817 = vmatpush1.xpose.msra.mxu0 0.0
        %818 = vmatprep.subr.mxu0 0.0
        %819 = vmatpush1.xpose.msra.mxu0 0.0
        %820 = vmatprep.subr.mxu0 0.0
        %821 = vmatpush1.xpose.msra.mxu0 0.0
        %822 = vmatprep.subr.mxu0 0.0
        %823 = vmatpush1.xpose.msra.mxu0 0.0
        %824 = vmatprep.subr.mxu0 0.0
        %825 = vmatpush1.xpose.msra.mxu0 0.0
        %826 = vmatprep.subr.mxu0 0.0
        %827 = vmatpush1.xpose.msra.mxu0 0.0
        %828 = vmatprep.subr.mxu0 0.0
        %829 = vmatpush1.xpose.msra.mxu0 0.0
        %830 = vmatprep.subr.mxu0 0.0
        %831 = vmatpush1.xpose.msra.mxu0 0.0
        %832 = vmatprep.subr.mxu0 0.0
        %833 = vmatpush1.xpose.msra.mxu0 0.0
        %834 = vmatprep.subr.mxu0 0.0
        %835 = vmatpush1.xpose.msra.mxu0 0.0
        %836 = vmatprep.subr.mxu0 0.0
        %837 = vmatpush1.xpose.msra.mxu0 0.0
        %838 = vmatprep.subr.mxu0 0.0
        %839 = vmatpush1.xpose.msra.mxu0 0.0
        %840 = vmatprep.subr.mxu0 0.0
        %841 = vmatpush1.xpose.msra.mxu0 0.0
        %842 = vmatprep.subr.mxu0 0.0
        %843 = vmatpush1.xpose.msra.mxu0 0.0
        %844 = vmatprep.subr.mxu0 0.0
        %845 = vmatpush1.xpose.msra.mxu0 0.0
        %846 = vmatprep.subr.mxu0 0.0
        %847 = vmatpush1.xpose.msra.mxu0 0.0
        %848 = vmatprep.subr.mxu0 0.0
        %849 = vmatpush1.xpose.msra.mxu0 0.0
        %850 = vmatprep.subr.mxu0 0.0
        %851 = vmatpush1.xpose.msra.mxu0 0.0
        %852 = vmatprep.subr.mxu0 0.0
        %853 = vmatpush1.xpose.msra.mxu0 0.0
        %854 = vmatprep.mubr.f32.mxu0 0.0
        %855 = vmatmul.mubr.f32.gmra.mrb[0].mxu0 %v786
        %v856 = vpop.f32.mrb[0].mxu0
        %v857 = vadd.f32 0.0, %v856
        %v858 = vpop.f32.mrb[0].mxu0
        %859 = vdwg.mxu0
        %v860 = vsel %vm357, %v857, -inf
        %861 = vmax.xlane.f32.xlu0 %v860
        %v862 = vpop.xlane.xlu0 %861
        %v863 = vsub.f32 %v857, %v862
        %v864 = vmul.f32 %v863, 1.442695
        %v865 = vpow.pop %v864
        %v866 = vsel %vm357, %v865, 0.0
        %867 = vadd.xlane.f32.xlu0 %v866
        %v868 = vpop.xlane.xlu0 %867
        %v869 = vrcp.pop %v868
        %v870 = vmul.f32 %v868, %v869
        %v871 = vsub.f32 2.0, %v870
        %v872 = vmul.f32 %v869, %v871
        %873 = vrot.lane.b32.xlu0 %v275, 80
        %v874 = vpop.permute.xlu0 %873
        %v877 = vsel %vm357, %v865, 0
        %879 = vmatprep.subr.mxu0 0.0
        %880 = vmatpush1.msra.mxu0 %v874
        %881 = vmatprep.subr.mxu0 0.0
        %882 = vmatpush1.msra.mxu0 0.0
        %883 = vmatprep.subr.mxu0 0.0
        %884 = vmatpush1.msra.mxu0 0.0
        %885 = vmatprep.subr.mxu0 0.0
        %886 = vmatpush1.msra.mxu0 0.0
        %887 = vmatprep.subr.mxu0 0.0
        %888 = vmatpush1.msra.mxu0 0.0
        %889 = vmatprep.subr.mxu0 0.0
        %890 = vmatpush1.msra.mxu0 0.0
        %891 = vmatprep.subr.mxu0 0.0
        %892 = vmatpush1.msra.mxu0 0.0
        %893 = vmatprep.subr.mxu0 0.0
        %894 = vmatpush1.msra.mxu0 0.0
        %895 = vmatprep.subr.mxu0 0.0
        %896 = vmatpush1.msra.mxu0 0.0
        %897 = vmatprep.subr.mxu0 0.0
        %898 = vmatpush1.msra.mxu0 0.0
        %899 = vmatprep.subr.mxu0 0.0
        %900 = vmatpush1.msra.mxu0 0.0
        %901 = vmatprep.subr.mxu0 0.0
        %902 = vmatpush1.msra.mxu0 0.0
        %903 = vmatprep.subr.mxu0 0.0
        %904 = vmatpush1.msra.mxu0 0.0
        %905 = vmatprep.subr.mxu0 0.0
        %906 = vmatpush1.msra.mxu0 0.0
        %907 = vmatprep.subr.mxu0 0.0
        %908 = vmatpush1.msra.mxu0 0.0
        %909 = vmatprep.subr.mxu0 0.0
        %910 = vmatpush1.msra.mxu0 0.0
        %911 = vmatprep.subr.mxu0 0.0
        %912 = vmatpush1.msra.mxu0 0.0
        %913 = vmatprep.subr.mxu0 0.0
        %914 = vmatpush1.msra.mxu0 0.0
        %915 = vmatprep.subr.mxu0 0.0
        %916 = vmatpush1.msra.mxu0 0.0
        %917 = vmatprep.subr.mxu0 0.0
        %918 = vmatpush1.msra.mxu0 0.0
        %919 = vmatprep.subr.mxu0 0.0
        %920 = vmatpush1.msra.mxu0 0.0
        %921 = vmatprep.subr.mxu0 0.0
        %922 = vmatpush1.msra.mxu0 0.0
        %923 = vmatprep.subr.mxu0 0.0
        %924 = vmatpush1.msra.mxu0 0.0
        %925 = vmatprep.subr.mxu0 0.0
        %926 = vmatpush1.msra.mxu0 0.0
        %927 = vmatprep.subr.mxu0 0.0
        %928 = vmatpush1.msra.mxu0 0.0
        %929 = vmatprep.subr.mxu0 0.0
        %930 = vmatpush1.msra.mxu0 0.0
        %931 = vmatprep.subr.mxu0 0.0
        %932 = vmatpush1.msra.mxu0 0.0
        %933 = vmatprep.subr.mxu0 0.0
        %934 = vmatpush1.msra.mxu0 0.0
        %935 = vmatprep.subr.mxu0 0.0
        %936 = vmatpush1.msra.mxu0 0.0
        %937 = vmatprep.subr.mxu0 0.0
        %938 = vmatpush1.msra.mxu0 0.0
        %939 = vmatprep.subr.mxu0 0.0
        %940 = vmatpush1.msra.mxu0 0.0
        %941 = vmatprep.subr.mxu0 0.0
        %942 = vmatpush1.msra.mxu0 0.0
        %943 = vmatprep.mubr.f32.mxu0 0.0
        %944 = vmatmul.mubr.f32.gmra.mrb[0].mxu0 %v877
        %v945 = vpop.f32.mrb[0].mxu0
        %v946 = vadd.f32 0.0, %v945
        %v947 = vpop.f32.mrb[0].mxu0
        %948 = vdwg.mxu0
        %v949 = vmul.f32 %v946, %v872
        %951 = vrot.lane.b32.xlu0 %v613, 16
        %v952 = vpop.permute.xlu0 %951
        %955 = vrot.lane.b32.xlu0 %v781, 32
        %v956 = vpop.permute.xlu0 %955
        %959 = vrot.lane.b32.xlu0 %v949, 48
        %v960 = vpop.permute.xlu0 %959
        %v962 = vsel %vm281, %v444, %v952
        %v963 = vsel %vm202, %v962, %v956
        %vm964 = vcmask 392192
        %v965 = vsel %vm964, %v963, %v960
        %v966 = vld [vmem:[%s2] sm:$0xff]
        %v967 = vld [vmem:[%s2 + $0x8] sm:$0xff]
        %v968 = vld [vmem:[%s2 + $0x10] sm:$0xff]
        %v969 = vld [vmem:[%s2 + $0x18] sm:$0xff]
        %v970 = vld [vmem:[%s2 + $0x20] sm:$0xff]
        %v971 = vld [vmem:[%s2 + $0x28] sm:$0xff]
        %v972 = vld [vmem:[%s2 + $0x30] sm:$0xff]
        %v973 = vld [vmem:[%s2 + $0x38] sm:$0xff]
        %v974 = vld [vmem:[%s3] sm:$0x1]
        %v976 = vlaneseq
        %v977 = vshrl.u32 %v976, 7
        %v978 = vsub.s32 0, %v977
        %v979 = vrot.slane %v974, %v978
        %vm981 = vcmask 523264
        %v983 = vsel %vm981, %v965, 0
        %985 = vmatprep.subr.mxu0 0.0
        %986 = vmatpush1.msra.mxu0 %v966
        %987 = vmatprep.subr.mxu0 0.0
        %988 = vmatpush1.msra.mxu0 %v967
        %989 = vmatprep.subr.mxu0 0.0
        %990 = vmatpush1.msra.mxu0 %v968
        %991 = vmatprep.subr.mxu0 0.0
        %992 = vmatpush1.msra.mxu0 %v969
        %993 = vmatprep.subr.mxu0 0.0
        %994 = vmatpush1.msra.mxu0 %v970
        %995 = vmatprep.subr.mxu0 0.0
        %996 = vmatpush1.msra.mxu0 %v971
        %997 = vmatprep.subr.mxu0 0.0
        %998 = vmatpush1.msra.mxu0 %v972
        %999 = vmatprep.subr.mxu0 0.0
        %1000 = vmatpush1.msra.mxu0 %v973
        %1001 = vmatprep.subr.mxu0 0.0
        %1002 = vmatpush1.msra.mxu0 0.0
        %1003 = vmatprep.subr.mxu0 0.0
        %1004 = vmatpush1.msra.mxu0 0.0
        %1005 = vmatprep.subr.mxu0 0.0
        %1006 = vmatpush1.msra.mxu0 0.0
        %1007 = vmatprep.subr.mxu0 0.0
        %1008 = vmatpush1.msra.mxu0 0.0
        %1009 = vmatprep.subr.mxu0 0.0
        %1010 = vmatpush1.msra.mxu0 0.0
        %1011 = vmatprep.subr.mxu0 0.0
        %1012 = vmatpush1.msra.mxu0 0.0
        %1013 = vmatprep.subr.mxu0 0.0
        %1014 = vmatpush1.msra.mxu0 0.0
        %1015 = vmatprep.subr.mxu0 0.0
        %1016 = vmatpush1.msra.mxu0 0.0
        %1017 = vmatprep.subr.mxu0 0.0
        %1018 = vmatpush1.msra.mxu0 0.0
        %1019 = vmatprep.subr.mxu0 0.0
        %1020 = vmatpush1.msra.mxu0 0.0
        %1021 = vmatprep.subr.mxu0 0.0
        %1022 = vmatpush1.msra.mxu0 0.0
        %1023 = vmatprep.subr.mxu0 0.0
        %1024 = vmatpush1.msra.mxu0 0.0
        %1025 = vmatprep.subr.mxu0 0.0
        %1026 = vmatpush1.msra.mxu0 0.0
        %1027 = vmatprep.subr.mxu0 0.0
        %1028 = vmatpush1.msra.mxu0 0.0
        %1029 = vmatprep.subr.mxu0 0.0
        %1030 = vmatpush1.msra.mxu0 0.0
        %1031 = vmatprep.subr.mxu0 0.0
        %1032 = vmatpush1.msra.mxu0 0.0
        %1033 = vmatprep.subr.mxu0 0.0
        %1034 = vmatpush1.msra.mxu0 0.0
        %1035 = vmatprep.subr.mxu0 0.0
        %1036 = vmatpush1.msra.mxu0 0.0
        %1037 = vmatprep.subr.mxu0 0.0
        %1038 = vmatpush1.msra.mxu0 0.0
        %1039 = vmatprep.subr.mxu0 0.0
        %1040 = vmatpush1.msra.mxu0 0.0
        %1041 = vmatprep.subr.mxu0 0.0
        %1042 = vmatpush1.msra.mxu0 0.0
        %1043 = vmatprep.subr.mxu0 0.0
        %1044 = vmatpush1.msra.mxu0 0.0
        %1045 = vmatprep.subr.mxu0 0.0
        %1046 = vmatpush1.msra.mxu0 0.0
        %1047 = vmatprep.subr.mxu0 0.0
        %1048 = vmatpush1.msra.mxu0 0.0
        %1049 = vmatprep.mubr.f32.mxu0 0.0
        %1050 = vmatmul.mubr.f32.gmra.mrb[0].mxu0 %v983
        %v1051 = vpop.f32.mrb[0].mxu0
        %v1052 = vadd.f32 %v979, %v1051
        %v1053 = vpop.f32.mrb[0].mxu0
        %1054 = vdwg.mxu0
        %1055 = vst.msk [vmem:[%s188] sm:$0xff] %vm202, %v1052
        %s1056 = sand.u32 %s115, 1
        %s1057 = scalar_lea.sflag [#allocation3], %s1056
        %s1058 = sand.u32 %s115, 1
        %s1059 = smul.addr %s1058, 8
        %s1060 = scalar_lea.vmem [#allocation2], %s1059
        // Predicated region
        $region37: #{tpu_custom_call.1} parent=35 // pred_check
          %p1061 = pneg %p125
        $region38: #{tpu_custom_call.1} parent=35 // pred_check_branch
          %1063 = sbr.rel (%p1061) target = $region40
        $region39: #{tpu_custom_call.1} parent=35 // pred_region
          %s1065 = ssub.s32 128, 128
          %1066 = vsyncadd %s1057, %s1065
          %s1067 = smul.addr %s18, 128
          %s1068 = scalar_lea.hbm %s4, %s1067
          %s1070 = sshll.u32 %s1060, 4
          %s1071 = int_to_ptr.vmem [resolvable:$true] %s1070
          %1073 = dma.vmem_to_hbm [thread:$0]  %s1071, 128, %s1068, %s1057
        $region40: #{tpu_custom_call.1} parent=35 // pred_fallthru
          _
      $region36: #{tpu_custom_call.1} parent=5 // pred_fallthru
        _
      %p1074 = scmp.le.s32.totalorder 2, %s13
      // Predicated region
      $region41: #{tpu_custom_call.1} parent=5 // pred_check
        %p1075 = pneg %p1074
      $region42: #{tpu_custom_call.1} parent=5 // pred_check_branch
        %1077 = sbr.rel (%p1075) target = $region44
      $region43: #{tpu_custom_call.1} parent=5 // pred_region
        %s1078 = ssub.s32 %s13, 2
        // Predicated region
        $region45: #{tpu_custom_call.1} parent=43 // pred_check
          %p1079 = pneg %p131
        $region46: #{tpu_custom_call.1} parent=43 // pred_check_branch
          %1081 = sbr.rel (%p1079) target = $region48
        $region47: #{tpu_custom_call.1} parent=43 // pred_region
          %s1082 = sand.u32 %s116, 1
          %s1083 = scalar_lea.sflag [#allocation3], %s1082
          %s1084 = sand.u32 %s116, 1
          %s1085 = smul.addr %s1084, 8
          %s1086 = scalar_lea.vmem [#allocation2], %s1085
          %1087 = dma.done %s1083, 128
        $region48: #{tpu_custom_call.1} parent=43 // pred_fallthru
          _
      $region44: #{tpu_custom_call.1} parent=5 // pred_fallthru
        _
    $region6: #{tpu_custom_call.1} parent=1 // loop_footer
      %s17 = sadd.s32 1, %s13
    $region7: #{tpu_custom_call.1} parent=1 // loop_footer_branch
      %12 = sbr.rel target = $region3
    $region8: #{tpu_custom_call.1} parent=1 // loop_exit
      _
    %1088 = vsyncpa [#allocation3], 1
    %s1089 = scalar_lea.sflag [#allocation3], 1
    %1090 = vsyncpa %s1089, 1

</llo_original>
